<compile_context>
chip_gen: v6e
topology: v6e:2x2x1
jax: 0.10.0
libtpu: 0.0.40
codegen_flags: <defaults>
</compile_context>

<pallas_src>
import math
import numpy as np
import jax
import jax.numpy as jnp
from jax.experimental import pallas as pl
from jax.experimental.pallas import tpu as pltpu


def _token_embedding_kernel(x_ref, w_ref, o_ref):
    # x_ref : [L + 2, C]   float32   (sequence with a 1-row circular halo on each side)
    # w_ref : [3*C, D]     bfloat16  (fused conv weight [W_k0; W_k1; W_k2])
    # o_ref : [tile_l, D]  float32
    tile_l, _ = o_ref.shape
    start = pl.multiple_of(pl.program_id(1) * tile_l, tile_l)

    # halo window covering rows [start, start + tile_l + 2) of the extended sequence
    win = x_ref[pl.ds(start, tile_l + 2), :]                       # [tile_l + 2, C]

    # im2col for k=3: act[t] = [x[t-1] | x[t] | x[t+1]]  ->  one K=3C matmul on the MXU
    act = jnp.concatenate(
        [win[0:tile_l, :], win[1:tile_l + 1, :], win[2:tile_l + 2, :]], axis=-1
    ).astype(w_ref.dtype)                                          # [tile_l, 3*C] bf16

    o_ref[...] = jnp.dot(
        act, w_ref[...], preferred_element_type=jnp.float32
    ).astype(o_ref.dtype)


def token_embedding(x, conv_w, *, tile_l=256, compute_dtype=jnp.bfloat16):
    """x: [B, L, c_in] f32; conv_w: [3, c_in, d_model] (torch weight [D, C, 3] transposed)."""
    B, L, C = x.shape
    D = conv_w.shape[-1]
    tile_l = min(tile_l, L)
    assert L % tile_l == 0 and tile_l % 8 == 0, "L must tile into multiples of 8"

    # Circular halo along the sequence axis: x_ext[:, i] == x[:, i-1] (wrapped), length L+2.
    # This keeps every L-tile's conv window contiguous, so no wrap handling in the kernel.
    x_ext = jnp.concatenate([x[:, L - 1:, :], x, x[:, :1, :]], axis=1)       # [B, L+2, C]
    # Fused weight: rows [W_k0; W_k1; W_k2] -> [3*C, D], fed to the MXU in bf16.
    w_cat = conv_w.reshape(3 * C, D).astype(compute_dtype)

    grid = (B, L // tile_l)
    return pl.pallas_call(
        _token_embedding_kernel,
        out_shape=jax.ShapeDtypeStruct((B, L, D), x.dtype),
        grid=grid,
        in_specs=[
            # Full (halo-extended) sequence of one batch element; block index is constant
            # along the inner L-tile axis, so it is only DMA'd when b changes.
            pl.BlockSpec((None, L + 2, C), lambda b, l: (b, 0, 0)),
            # Grid-invariant fused weight (single small block, never re-fetched).
            pl.BlockSpec((3 * C, D), lambda b, l: (0, 0)),
        ],
        # Lane-dense output tile (d_model kept a multiple of 128).
        out_specs=pl.BlockSpec((None, tile_l, D), lambda b, l: (b, l, 0)),
        compiler_params=pltpu.CompilerParams(
            dimension_semantics=("parallel", "parallel")),
    )(x_ext, w_cat)


# ---------------- parameter construction + reference (host side) ----------------

def make_conv_weight(c_in, d_model, key):
    # Conv1d weight, kaiming_normal_(fan_in, nonlinearity='leaky_relu'):
    # std = gain / sqrt(fan_in) with fan_in = c_in * kernel_size.
    gain = math.sqrt(2.0 / (1.0 + 0.01 ** 2))
    std = gain / math.sqrt(c_in * 3)
    # Stored as [k, c_in, d_model] (== torch weight [d_model, c_in, k] transposed).
    return std * jax.random.normal(key, (3, c_in, d_model), dtype=jnp.float32)


def reference(x, conv_w):
    # out[t] = x[t-1] @ W0 + x[t] @ W1 + x[t+1] @ W2   (circular), pure f32.
    return (jnp.roll(x, 1, axis=1) @ conv_w[0]
            + x @ conv_w[1]
            + jnp.roll(x, -1, axis=1) @ conv_w[2])


if __name__ == "__main__":
    # d_model chosen as a multiple of 128 (lane-dense stores); L large enough to give a
    # 4-step fully parallel (B x L-tiles) grid.
    B, L, C_IN, D_MODEL = 2, 512, 4, 128

    key = jax.random.PRNGKey(0)
    kx, kw = jax.random.split(key)
    x = jax.random.normal(kx, (B, L, C_IN), dtype=jnp.float32)
    conv_w = make_conv_weight(C_IN, D_MODEL, kw)

    out = jax.block_until_ready(token_embedding(x, conv_w))

    ref = reference(x, conv_w)
    # bf16 MXU inputs with f32 accumulation vs. pure-f32 reference.
    np.testing.assert_allclose(np.asarray(out), np.asarray(ref), rtol=2e-2, atol=2e-2)

    print("KERNEL_OK")
</pallas_src>

<mosaic_0001>
module attributes {stable_mosaic.version = 11 : i64} {
  func.func @_token_embedding_kernel(%arg0: i32, %arg1: i32, %arg2: memref<1x514x4xf32, #tpu.memory_space<vmem>>, %arg3: memref<12x128xbf16, #tpu.memory_space<vmem>>, %arg4: memref<1x256x128xf32, #tpu.memory_space<vmem>>) attributes {dimension_semantics = [#tpu.dimension_semantics<parallel>, #tpu.dimension_semantics<parallel>], iteration_bounds = array<i64: 2, 2>, scalar_prefetch = 0 : i64, scratch_operands = 0 : i64, tpu.core_type = #tpu.core_type<tc>, window_params = [{transform_indices = @transform_0, window_bounds = array<i64: 1, 514, 4>}, {pipeline_mode = #tpu.pipeline_mode<synchronous>, transform_indices = @transform_1, window_bounds = array<i64: 12, 128>}, {transform_indices = @transform_2, window_bounds = array<i64: 1, 256, 128>}]} {
    %c256_i32 = arith.constant 256 : i32
    %0 = arith.muli %arg1, %c256_i32 : i32
    %1 = tpu.assume_multiple %0, 256 : i32
    %c0 = arith.constant 0 : index
    %2 = arith.index_cast %1 : i32 to index
    %c0_0 = arith.constant 0 : index
    %3 = vector.load %arg2[%c0, %2, %c0_0] : memref<1x514x4xf32, #tpu.memory_space<vmem>>, vector<1x258x4xf32>
    %4 = vector.shape_cast %3 : vector<1x258x4xf32> to vector<258x4xf32>
    %5 = vector.extract_strided_slice %4 {offsets = [0, 0], sizes = [256, 4], strides = [1, 1]} : vector<258x4xf32> to vector<256x4xf32>
    %6 = vector.extract_strided_slice %4 {offsets = [1, 0], sizes = [256, 4], strides = [1, 1]} : vector<258x4xf32> to vector<256x4xf32>
    %7 = vector.extract_strided_slice %4 {offsets = [2, 0], sizes = [256, 4], strides = [1, 1]} : vector<258x4xf32> to vector<256x4xf32>
    %8 = tpu.concatenate %5, %6, %7 in 1 : vector<256x4xf32>, vector<256x4xf32>, vector<256x4xf32> -> vector<256x12xf32>
    %9 = arith.truncf %8 : vector<256x12xf32> to vector<256x12xbf16>
    %c0_1 = arith.constant 0 : index
    %c0_2 = arith.constant 0 : index
    %10 = vector.load %arg3[%c0_1, %c0_2] : memref<12x128xbf16, #tpu.memory_space<vmem>>, vector<12x128xbf16>
    %cst = arith.constant dense<0.000000e+00> : vector<256x128xf32>
    %11 = tpu.matmul %9, %10, %cst {dimension_numbers = #tpu.dot_dimension_numbers<[1], [0], [0], [1], [0, 0, 1, 1], [], []>} : vector<256x12xbf16>, vector<12x128xbf16>, vector<256x128xf32> -> vector<256x128xf32>
    %c0_3 = arith.constant 0 : index
    %c0_4 = arith.constant 0 : index
    %c0_5 = arith.constant 0 : index
    %12 = vector.load %arg4[%c0_3, %c0_4, %c0_5] : memref<1x256x128xf32, #tpu.memory_space<vmem>>, vector<1x256x128xf32>
    %13 = vector.shape_cast %12 : vector<1x256x128xf32> to vector<256x128xf32>
    %14 = vector.shape_cast %11 : vector<256x128xf32> to vector<1x256x128xf32>
    tpu.vector_store %arg4[%c0_3, %c0_4, %c0_5], %14 {strides = array<i32>} : memref<1x256x128xf32, #tpu.memory_space<vmem>>, vector<1x256x128xf32>,
    return
  }
  func.func @transform_0(%arg0: i32, %arg1: i32) -> (i32, i32, i32) {
    %c0_i32 = arith.constant 0 : i32
    %c0_i32_0 = arith.constant 0 : i32
    %c0_i32_1 = arith.constant 0 : i32
    return %arg0, %c0_i32, %c0_i32_0 : i32, i32, i32
  }
  func.func @transform_1(%arg0: i32, %arg1: i32) -> (i32, i32) {
    %c0_i32 = arith.constant 0 : i32
    %c0_i32_0 = arith.constant 0 : i32
    %c0_i32_1 = arith.constant 0 : i32
    return %c0_i32, %c0_i32_0 : i32, i32
  }
  func.func @transform_2(%arg0: i32, %arg1: i32) -> (i32, i32, i32) {
    %c0_i32 = arith.constant 0 : i32
    %c0_i32_0 = arith.constant 0 : i32
    return %arg0, %arg1, %c0_i32 : i32, i32, i32
  }
}

</mosaic_0001>

<llo_original>
// kernel: tpu_custom_call.1
$region0: #{tpu_custom_call.1}
  #allocation0 [shape = 'u32[]', space=smem, size = 0x4, offset = 0x4, fixed_abs, tag = 'smem constant byte address 0x4 - core index']
  #allocation1 [shape = 'u32[144,128]{1,0:T(1,128)}', space=vmem, size = 0x12000, scoped, tag = 'internal scratch']
  %s0 = inlined_call_operand.vmem [shape: f32[2,514,4], index: 0, kind: input, shape index: {}]
  %s1 = inlined_call_operand.vmem [shape: bf16[12,128], index: 1, kind: input, shape index: {}]
  %s2 = inlined_call_operand.hbm [shape: f32[2,512,128], index: 2, kind: output, shape index: {}]
  %s3 = sld [smem:[#allocation0]]
  $region41: #{tpu_custom_call.1} parent=0
    _
  %s5 = ssub.s32 1, %s3
  %s6 = scalar_select 0, %s5, %s3
  $region1: #{tpu_custom_call.1} parent=0
    #allocation2 [shape = 'u8[262144]{0}', space=vmem, size = 0x40000, scoped, tag = 'output window, operand 0']
    #allocation3 [shape = 's32[2]{0}', space=sflag, size = 0x8, scoped, tag = 'scoped memory for tpu_custom_call.1']
    %7 = vsyncpa [#allocation3], 0
    %s8 = scalar_lea.sflag [#allocation3], 1
    %9 = vsyncpa %s8, 0
    loop: start=0, step=1, limit=6
    $region2: #{tpu_custom_call.1} parent=1 // loop_pre_header
      _
    $region3: #{tpu_custom_call.1} parent=1 // loop_header
      %s11 = sphi 0, %s15
      %p12 = scmp.ge.s32.totalorder %s11, 6
      %s18 = sphi 0, %s30
      %s19 = sphi 0, %s26
      %s20 = sphi 0, %s18
      %s21 = sphi 0, %s19
      %s22 = sphi 0, %s20
      %s23 = sphi 0, %s21
      %s33 = sphi 0, %s35
      %s36 = sphi 0, %s33
      %s37 = sphi 0, %s36
      %s53 = sphi 0, %s37
      %s57 = sphi 0, %s57
      %s59 = sphi 0, %s57
      %s60 = sphi 0, %s59
      %s74 = sphi 0, %s60
      %s82 = sphi 0, %s84
      %s85 = sphi 0, %s82
      %s86 = sphi 0, %s85
      %s102 = sphi 0, %s86
    $region4: #{tpu_custom_call.1} parent=1 // loop_header_branch
      %14 = sbr.rel (%p12) target = $region8
    $region5: #{tpu_custom_call.1} parent=1 // loop_body
      %s16 = ssub.s32 %s11, 1
      %s17 = ssub.s32 %s11, 2
      %s24 = sadd.s32 1, %s19
      %p25 = scmp.ge.s32.totalorder %s24, 2
      %s26 = scalar_select %p25, 0, %s24
      %s27 = sadd.s32 1, %s18
      %s28 = scalar_select %p25, %s27, %s18
      %p29 = scmp.ge.s32.totalorder %s28, 2
      %s30 = scalar_select %p29, 0, %s28
      %s31 = ssub.s32 %s18, %s30
      %p32 = scmp.eq.s32.totalorder %s31, 0
      %s34 = sadd.s32 %s33, 1
      %s35 = scalar_select %p32, %s33, %s34
      %p38 = pneg %p32
      %p39 = scmp.eq.s32.totalorder %s11, 3
      %p40 = por %p38, %p39
      %p41 = scmp.ne.s32.totalorder %s33, %s36
      %p42 = scmp.eq.s32.totalorder %s11, 0
      %p43 = por %p41, %p42
      %p44 = scmp.ne.s32.totalorder %s33, %s36
      %p45 = scmp.eq.s32.totalorder %s16, 3
      %p46 = por %p44, %p45
      %p47 = scmp.ne.s32.totalorder %s36, %s37
      %p48 = scmp.eq.s32.totalorder %s16, 0
      %p49 = por %p47, %p48
      %p50 = scmp.ne.s32.totalorder %s36, %s37
      %p51 = scmp.eq.s32.totalorder %s17, 3
      %p52 = por %p50, %p51
      %p54 = scmp.ne.s32.totalorder %s37, %s53
      %p55 = scmp.eq.s32.totalorder %s17, 0
      %p56 = por %p54, %p55
      %s58 = sadd.s32 %s57, 1
      %p61 = scmp.eq.s32.totalorder %s11, 3
      %p62 = scmp.ne.s32.totalorder %s57, %s59
      %p63 = scmp.eq.s32.totalorder %s11, 0
      %p64 = por %p62, %p63
      %p65 = scmp.ne.s32.totalorder %s57, %s59
      %p66 = scmp.eq.s32.totalorder %s16, 3
      %p67 = por %p65, %p66
      %p68 = scmp.ne.s32.totalorder %s59, %s60
      %p69 = scmp.eq.s32.totalorder %s16, 0
      %p70 = por %p68, %p69
      %p71 = scmp.ne.s32.totalorder %s59, %s60
      %p72 = scmp.eq.s32.totalorder %s17, 3
      %p73 = por %p71, %p72
      %p75 = scmp.ne.s32.totalorder %s60, %s74
      %p76 = scmp.eq.s32.totalorder %s17, 0
      %p77 = por %p75, %p76
      %s78 = ssub.s32 %s18, %s30
      %s79 = ssub.s32 %s19, %s26
      %s80 = sor.u32 %s78, %s79
      %p81 = scmp.eq.s32.totalorder %s80, 0
      %s83 = sadd.s32 %s82, 1
      %s84 = scalar_select %p81, %s82, %s83
      %p87 = pneg %p81
      %p88 = scmp.eq.s32.totalorder %s11, 3
      %p89 = por %p87, %p88
      %p90 = scmp.ne.s32.totalorder %s82, %s85
      %p91 = scmp.eq.s32.totalorder %s11, 0
      %p92 = por %p90, %p91
      %p93 = scmp.ne.s32.totalorder %s82, %s85
      %p94 = scmp.eq.s32.totalorder %s16, 3
      %p95 = por %p93, %p94
      %p96 = scmp.ne.s32.totalorder %s85, %s86
      %p97 = scmp.eq.s32.totalorder %s16, 0
      %p98 = por %p96, %p97
      %p99 = scmp.ne.s32.totalorder %s85, %s86
      %p100 = scmp.eq.s32.totalorder %s17, 3
      %p101 = por %p99, %p100
      %p103 = scmp.ne.s32.totalorder %s86, %s102
      %p104 = scmp.eq.s32.totalorder %s17, 0
      %p105 = por %p103, %p104
      %p106 = scmp.le.s32.totalorder 1, %s11
      %p107 = scmp.lt.s32.totalorder %s11, 5
      %p108 = pnand %p106, %p107
      %p109 = pneg %p108
      // Predicated region
      $region9: #{tpu_custom_call.1} parent=5 // pred_check
        _
      $region10: #{tpu_custom_call.1} parent=5 // pred_check_branch
        %111 = sbr.rel (%p108) target = $region12
      $region11: #{tpu_custom_call.1} parent=5 // pred_region
        %s112 = ssub.s32 %s11, 1
        // Predicated region
        $region13: #{tpu_custom_call.1} parent=11 // pred_check
          %p113 = pneg %p70
        $region14: #{tpu_custom_call.1} parent=11 // pred_check_branch
          %115 = sbr.rel (%p113) target = $region16
        $region15: #{tpu_custom_call.1} parent=11 // pred_region
          _
        $region16: #{tpu_custom_call.1} parent=11 // pred_fallthru
          _
      $region12: #{tpu_custom_call.1} parent=5 // pred_fallthru
        _
      %p116 = scmp.lt.s32.totalorder %s11, 4
      // Predicated region
      $region17: #{tpu_custom_call.1} parent=5 // pred_check
        %p117 = pneg %p116
      $region18: #{tpu_custom_call.1} parent=5 // pred_check_branch
        %119 = sbr.rel (%p117) target = $region20
      $region19: #{tpu_custom_call.1} parent=5 // pred_region
        // Predicated region
        $region21: #{tpu_custom_call.1} parent=19 // pred_check
          %p120 = pneg %p43
        $region22: #{tpu_custom_call.1} parent=19 // pred_check_branch
          %122 = sbr.rel (%p120) target = $region24
        $region23: #{tpu_custom_call.1} parent=19 // pred_region
          %p123 = scmp.lt.s32.totalorder %s18, 1
          %s124 = scalar_select %p123, %s18, 1
          %s125 = smul.addr %s124, 65
          %s126 = smul.addr %s125, 8
          %s127 = scalar_lea.vmem %s0, %s126
        $region24: #{tpu_custom_call.1} parent=19 // pred_fallthru
          _
      $region20: #{tpu_custom_call.1} parent=5 // pred_fallthru
        _
      %p128 = scmp.le.s32.totalorder 1, %s11
      %p129 = scmp.lt.s32.totalorder %s11, 5
      %p130 = pnand %p128, %p129
      %p131 = pneg %p130
      // Predicated region
      $region25: #{tpu_custom_call.1} parent=5 // pred_check
        _
      $region26: #{tpu_custom_call.1} parent=5 // pred_check_branch
        %133 = sbr.rel (%p130) target = $region28
      $region27: #{tpu_custom_call.1} parent=5 // pred_region
        %s134 = ssub.s32 %s11, 1
        %p135 = scmp.lt.s32.totalorder %s20, 1
        %s136 = scalar_select %p135, %s20, 1
        %s137 = smul.addr %s136, 65
        %s138 = smul.addr %s137, 8
        %s139 = scalar_lea.vmem %s0, %s138
        %p140 = pneg %p49
        %p141 = pneg %p46
        %p142 = pneg %p70
        %p143 = pneg %p67
        %p144 = pneg %p98
        %p145 = pneg %p95
        %s146 = sand.u32 %s85, 1
        %s147 = scalar_lea.sflag [#allocation3], %s146
        %s148 = sand.u32 %s85, 1
        %s149 = smul.addr %s148, 256
        %s150 = scalar_lea.vmem [#allocation2], %s149
        %p151 = scmp.lt.s32.totalorder %s20, 1
        %s152 = scalar_select %p151, %s20, 1
        %s153 = smul.addr %s152, 65
        %s154 = smul.addr %s153, 8
        %s155 = scalar_lea.vmem %s0, %s154
        %s156 = smul.u32 32, %s21
        %s158 = smul.u32 %s21, 256
        %s159 = scalar_lea.vmem %s155, %s158
        %v160 = vld [vmem:[%s159] sm:$0xff]
        %v161 = vld [vmem:[%s159 + $0x8] sm:$0xff]
        %v162 = vld [vmem:[%s159 + $0x10] sm:$0xff]
        %v163 = vld [vmem:[%s159 + $0x18] sm:$0xff]
        %v164 = vld [vmem:[%s159 + $0x20] sm:$0xff]
        %v165 = vld [vmem:[%s159 + $0x28] sm:$0xff]
        %v166 = vld [vmem:[%s159 + $0x30] sm:$0xff]
        %v167 = vld [vmem:[%s159 + $0x38] sm:$0xff]
        %v168 = vld [vmem:[%s159 + $0x40] sm:$0xff]
        %v169 = vld [vmem:[%s159 + $0x48] sm:$0xff]
        %v170 = vld [vmem:[%s159 + $0x50] sm:$0xff]
        %v171 = vld [vmem:[%s159 + $0x58] sm:$0xff]
        %v172 = vld [vmem:[%s159 + $0x60] sm:$0xff]
        %v173 = vld [vmem:[%s159 + $0x68] sm:$0xff]
        %v174 = vld [vmem:[%s159 + $0x70] sm:$0xff]
        %v175 = vld [vmem:[%s159 + $0x78] sm:$0xff]
        %v176 = vld [vmem:[%s159 + $0x80] sm:$0xff]
        %v177 = vld [vmem:[%s159 + $0x88] sm:$0xff]
        %v178 = vld [vmem:[%s159 + $0x90] sm:$0xff]
        %v179 = vld [vmem:[%s159 + $0x98] sm:$0xff]
        %v180 = vld [vmem:[%s159 + $0xa0] sm:$0xff]
        %v181 = vld [vmem:[%s159 + $0xa8] sm:$0xff]
        %v182 = vld [vmem:[%s159 + $0xb0] sm:$0xff]
        %v183 = vld [vmem:[%s159 + $0xb8] sm:$0xff]
        %v184 = vld [vmem:[%s159 + $0xc0] sm:$0xff]
        %v185 = vld [vmem:[%s159 + $0xc8] sm:$0xff]
        %v186 = vld [vmem:[%s159 + $0xd0] sm:$0xff]
        %v187 = vld [vmem:[%s159 + $0xd8] sm:$0xff]
        %v188 = vld [vmem:[%s159 + $0xe0] sm:$0xff]
        %v189 = vld [vmem:[%s159 + $0xe8] sm:$0xff]
        %v190 = vld [vmem:[%s159 + $0xf0] sm:$0xff]
        %v191 = vld [vmem:[%s159 + $0xf8] sm:$0xff]
        %v192 = vld [vmem:[%s159 + $0x100] sm:$0x3]
        %vm226 = vcmask 1046528
        %v227 = vrot.slane %v160, 1
        %v228 = vrot.slane %v161, 1
        %v229 = vsel %vm226, %v227, %v228
        %v230 = vrot.slane %v162, 1
        %v231 = vsel %vm226, %v228, %v230
        %v232 = vrot.slane %v163, 1
        %v233 = vsel %vm226, %v230, %v232
        %v234 = vrot.slane %v164, 1
        %v235 = vsel %vm226, %v232, %v234
        %v236 = vrot.slane %v165, 1
        %v237 = vsel %vm226, %v234, %v236
        %v238 = vrot.slane %v166, 1
        %v239 = vsel %vm226, %v236, %v238
        %v240 = vrot.slane %v167, 1
        %v241 = vsel %vm226, %v238, %v240
        %v242 = vrot.slane %v168, 1
        %v243 = vsel %vm226, %v240, %v242
        %v244 = vrot.slane %v169, 1
        %v245 = vsel %vm226, %v242, %v244
        %v246 = vrot.slane %v170, 1
        %v247 = vsel %vm226, %v244, %v246
        %v248 = vrot.slane %v171, 1
        %v249 = vsel %vm226, %v246, %v248
        %v250 = vrot.slane %v172, 1
        %v251 = vsel %vm226, %v248, %v250
        %v252 = vrot.slane %v173, 1
        %v253 = vsel %vm226, %v250, %v252
        %v254 = vrot.slane %v174, 1
        %v255 = vsel %vm226, %v252, %v254
        %v256 = vrot.slane %v175, 1
        %v257 = vsel %vm226, %v254, %v256
        %v258 = vrot.slane %v176, 1
        %v259 = vsel %vm226, %v256, %v258
        %v260 = vrot.slane %v177, 1
        %v261 = vsel %vm226, %v258, %v260
        %v262 = vrot.slane %v178, 1
        %v263 = vsel %vm226, %v260, %v262
        %v264 = vrot.slane %v179, 1
        %v265 = vsel %vm226, %v262, %v264
        %v266 = vrot.slane %v180, 1
        %v267 = vsel %vm226, %v264, %v266
        %v268 = vrot.slane %v181, 1
        %v269 = vsel %vm226, %v266, %v268
        %v270 = vrot.slane %v182, 1
        %v271 = vsel %vm226, %v268, %v270
        %v272 = vrot.slane %v183, 1
        %v273 = vsel %vm226, %v270, %v272
        %v274 = vrot.slane %v184, 1
        %v275 = vsel %vm226, %v272, %v274
        %v276 = vrot.slane %v185, 1
        %v277 = vsel %vm226, %v274, %v276
        %v278 = vrot.slane %v186, 1
        %v279 = vsel %vm226, %v276, %v278
        %v280 = vrot.slane %v187, 1
        %v281 = vsel %vm226, %v278, %v280
        %v282 = vrot.slane %v188, 1
        %v283 = vsel %vm226, %v280, %v282
        %v284 = vrot.slane %v189, 1
        %v285 = vsel %vm226, %v282, %v284
        %v286 = vrot.slane %v190, 1
        %v287 = vsel %vm226, %v284, %v286
        %v288 = vrot.slane %v191, 1
        %v289 = vsel %vm226, %v286, %v288
        %v290 = vrot.slane %v192, 1
        %v291 = vsel %vm226, %v288, %v290
        %292 = vrot.lane.b32.xlu0 %v229, 4
        %v293 = vpop.permute.xlu0 %292
        %294 = vrot.lane.b32.xlu0 %v231, 4
        %v295 = vpop.permute.xlu0 %294
        %296 = vrot.lane.b32.xlu0 %v233, 4
        %v297 = vpop.permute.xlu0 %296
        %298 = vrot.lane.b32.xlu0 %v235, 4
        %v299 = vpop.permute.xlu0 %298
        %300 = vrot.lane.b32.xlu0 %v237, 4
        %v301 = vpop.permute.xlu0 %300
        %302 = vrot.lane.b32.xlu0 %v239, 4
        %v303 = vpop.permute.xlu0 %302
        %304 = vrot.lane.b32.xlu0 %v241, 4
        %v305 = vpop.permute.xlu0 %304
        %306 = vrot.lane.b32.xlu0 %v243, 4
        %v307 = vpop.permute.xlu0 %306
        %308 = vrot.lane.b32.xlu0 %v245, 4
        %v309 = vpop.permute.xlu0 %308
        %310 = vrot.lane.b32.xlu0 %v247, 4
        %v311 = vpop.permute.xlu0 %310
        %312 = vrot.lane.b32.xlu0 %v249, 4
        %v313 = vpop.permute.xlu0 %312
        %314 = vrot.lane.b32.xlu0 %v251, 4
        %v315 = vpop.permute.xlu0 %314
        %316 = vrot.lane.b32.xlu0 %v253, 4
        %v317 = vpop.permute.xlu0 %316
        %318 = vrot.lane.b32.xlu0 %v255, 4
        %v319 = vpop.permute.xlu0 %318
        %320 = vrot.lane.b32.xlu0 %v257, 4
        %v321 = vpop.permute.xlu0 %320
        %322 = vrot.lane.b32.xlu0 %v259, 4
        %v323 = vpop.permute.xlu0 %322
        %324 = vrot.lane.b32.xlu0 %v261, 4
        %v325 = vpop.permute.xlu0 %324
        %326 = vrot.lane.b32.xlu0 %v263, 4
        %v327 = vpop.permute.xlu0 %326
        %328 = vrot.lane.b32.xlu0 %v265, 4
        %v329 = vpop.permute.xlu0 %328
        %330 = vrot.lane.b32.xlu0 %v267, 4
        %v331 = vpop.permute.xlu0 %330
        %332 = vrot.lane.b32.xlu0 %v269, 4
        %v333 = vpop.permute.xlu0 %332
        %334 = vrot.lane.b32.xlu0 %v271, 4
        %v335 = vpop.permute.xlu0 %334
        %336 = vrot.lane.b32.xlu0 %v273, 4
        %v337 = vpop.permute.xlu0 %336
        %338 = vrot.lane.b32.xlu0 %v275, 4
        %v339 = vpop.permute.xlu0 %338
        %340 = vrot.lane.b32.xlu0 %v277, 4
        %v341 = vpop.permute.xlu0 %340
        %342 = vrot.lane.b32.xlu0 %v279, 4
        %v343 = vpop.permute.xlu0 %342
        %344 = vrot.lane.b32.xlu0 %v281, 4
        %v345 = vpop.permute.xlu0 %344
        %346 = vrot.lane.b32.xlu0 %v283, 4
        %v347 = vpop.permute.xlu0 %346
        %348 = vrot.lane.b32.xlu0 %v285, 4
        %v349 = vpop.permute.xlu0 %348
        %350 = vrot.lane.b32.xlu0 %v287, 4
        %v351 = vpop.permute.xlu0 %350
        %352 = vrot.lane.b32.xlu0 %v289, 4
        %v353 = vpop.permute.xlu0 %352
        %354 = vrot.lane.b32.xlu0 %v291, 4
        %v355 = vpop.permute.xlu0 %354
        %vm388 = vcmask 1045504
        %v389 = vrot.slane %v160, 2
        %v390 = vrot.slane %v161, 2
        %v391 = vsel %vm388, %v389, %v390
        %v392 = vrot.slane %v162, 2
        %v393 = vsel %vm388, %v390, %v392
        %v394 = vrot.slane %v163, 2
        %v395 = vsel %vm388, %v392, %v394
        %v396 = vrot.slane %v164, 2
        %v397 = vsel %vm388, %v394, %v396
        %v398 = vrot.slane %v165, 2
        %v399 = vsel %vm388, %v396, %v398
        %v400 = vrot.slane %v166, 2
        %v401 = vsel %vm388, %v398, %v400
        %v402 = vrot.slane %v167, 2
        %v403 = vsel %vm388, %v400, %v402
        %v404 = vrot.slane %v168, 2
        %v405 = vsel %vm388, %v402, %v404
        %v406 = vrot.slane %v169, 2
        %v407 = vsel %vm388, %v404, %v406
        %v408 = vrot.slane %v170, 2
        %v409 = vsel %vm388, %v406, %v408
        %v410 = vrot.slane %v171, 2
        %v411 = vsel %vm388, %v408, %v410
        %v412 = vrot.slane %v172, 2
        %v413 = vsel %vm388, %v410, %v412
        %v414 = vrot.slane %v173, 2
        %v415 = vsel %vm388, %v412, %v414
        %v416 = vrot.slane %v174, 2
        %v417 = vsel %vm388, %v414, %v416
        %v418 = vrot.slane %v175, 2
        %v419 = vsel %vm388, %v416, %v418
        %v420 = vrot.slane %v176, 2
        %v421 = vsel %vm388, %v418, %v420
        %v422 = vrot.slane %v177, 2
        %v423 = vsel %vm388, %v420, %v422
        %v424 = vrot.slane %v178, 2
        %v425 = vsel %vm388, %v422, %v424
        %v426 = vrot.slane %v179, 2
        %v427 = vsel %vm388, %v424, %v426
        %v428 = vrot.slane %v180, 2
        %v429 = vsel %vm388, %v426, %v428
        %v430 = vrot.slane %v181, 2
        %v431 = vsel %vm388, %v428, %v430
        %v432 = vrot.slane %v182, 2
        %v433 = vsel %vm388, %v430, %v432
        %v434 = vrot.slane %v183, 2
        %v435 = vsel %vm388, %v432, %v434
        %v436 = vrot.slane %v184, 2
        %v437 = vsel %vm388, %v434, %v436
        %v438 = vrot.slane %v185, 2
        %v439 = vsel %vm388, %v436, %v438
        %v440 = vrot.slane %v186, 2
        %v441 = vsel %vm388, %v438, %v440
        %v442 = vrot.slane %v187, 2
        %v443 = vsel %vm388, %v440, %v442
        %v444 = vrot.slane %v188, 2
        %v445 = vsel %vm388, %v442, %v444
        %v446 = vrot.slane %v189, 2
        %v447 = vsel %vm388, %v444, %v446
        %v448 = vrot.slane %v190, 2
        %v449 = vsel %vm388, %v446, %v448
        %v450 = vrot.slane %v191, 2
        %v451 = vsel %vm388, %v448, %v450
        %v452 = vrot.slane %v192, 2
        %v453 = vsel %vm388, %v450, %v452
        %454 = vrot.lane.b32.xlu0 %v391, 8
        %v455 = vpop.permute.xlu0 %454
        %456 = vrot.lane.b32.xlu0 %v393, 8
        %v457 = vpop.permute.xlu0 %456
        %458 = vrot.lane.b32.xlu0 %v395, 8
        %v459 = vpop.permute.xlu0 %458
        %460 = vrot.lane.b32.xlu0 %v397, 8
        %v461 = vpop.permute.xlu0 %460
        %462 = vrot.lane.b32.xlu0 %v399, 8
        %v463 = vpop.permute.xlu0 %462
        %464 = vrot.lane.b32.xlu0 %v401, 8
        %v465 = vpop.permute.xlu0 %464
        %466 = vrot.lane.b32.xlu0 %v403, 8
        %v467 = vpop.permute.xlu0 %466
        %468 = vrot.lane.b32.xlu0 %v405, 8
        %v469 = vpop.permute.xlu0 %468
        %470 = vrot.lane.b32.xlu0 %v407, 8
        %v471 = vpop.permute.xlu0 %470
        %472 = vrot.lane.b32.xlu0 %v409, 8
        %v473 = vpop.permute.xlu0 %472
        %474 = vrot.lane.b32.xlu0 %v411, 8
        %v475 = vpop.permute.xlu0 %474
        %476 = vrot.lane.b32.xlu0 %v413, 8
        %v477 = vpop.permute.xlu0 %476
        %478 = vrot.lane.b32.xlu0 %v415, 8
        %v479 = vpop.permute.xlu0 %478
        %480 = vrot.lane.b32.xlu0 %v417, 8
        %v481 = vpop.permute.xlu0 %480
        %482 = vrot.lane.b32.xlu0 %v419, 8
        %v483 = vpop.permute.xlu0 %482
        %484 = vrot.lane.b32.xlu0 %v421, 8
        %v485 = vpop.permute.xlu0 %484
        %486 = vrot.lane.b32.xlu0 %v423, 8
        %v487 = vpop.permute.xlu0 %486
        %488 = vrot.lane.b32.xlu0 %v425, 8
        %v489 = vpop.permute.xlu0 %488
        %490 = vrot.lane.b32.xlu0 %v427, 8
        %v491 = vpop.permute.xlu0 %490
        %492 = vrot.lane.b32.xlu0 %v429, 8
        %v493 = vpop.permute.xlu0 %492
        %494 = vrot.lane.b32.xlu0 %v431, 8
        %v495 = vpop.permute.xlu0 %494
        %496 = vrot.lane.b32.xlu0 %v433, 8
        %v497 = vpop.permute.xlu0 %496
        %498 = vrot.lane.b32.xlu0 %v435, 8
        %v499 = vpop.permute.xlu0 %498
        %500 = vrot.lane.b32.xlu0 %v437, 8
        %v501 = vpop.permute.xlu0 %500
        %502 = vrot.lane.b32.xlu0 %v439, 8
        %v503 = vpop.permute.xlu0 %502
        %504 = vrot.lane.b32.xlu0 %v441, 8
        %v505 = vpop.permute.xlu0 %504
        %506 = vrot.lane.b32.xlu0 %v443, 8
        %v507 = vpop.permute.xlu0 %506
        %508 = vrot.lane.b32.xlu0 %v445, 8
        %v509 = vpop.permute.xlu0 %508
        %510 = vrot.lane.b32.xlu0 %v447, 8
        %v511 = vpop.permute.xlu0 %510
        %512 = vrot.lane.b32.xlu0 %v449, 8
        %v513 = vpop.permute.xlu0 %512
        %514 = vrot.lane.b32.xlu0 %v451, 8
        %v515 = vpop.permute.xlu0 %514
        %516 = vrot.lane.b32.xlu0 %v453, 8
        %v517 = vpop.permute.xlu0 %516
        %vm550 = vcmask 31744
        %v551 = vsel %vm550, %v160, %v293
        %v552 = vsel %vm550, %v161, %v295
        %v553 = vsel %vm550, %v162, %v297
        %v554 = vsel %vm550, %v163, %v299
        %v555 = vsel %vm550, %v164, %v301
        %v556 = vsel %vm550, %v165, %v303
        %v557 = vsel %vm550, %v166, %v305
        %v558 = vsel %vm550, %v167, %v307
        %v559 = vsel %vm550, %v168, %v309
        %v560 = vsel %vm550, %v169, %v311
        %v561 = vsel %vm550, %v170, %v313
        %v562 = vsel %vm550, %v171, %v315
        %v563 = vsel %vm550, %v172, %v317
        %v564 = vsel %vm550, %v173, %v319
        %v565 = vsel %vm550, %v174, %v321
        %v566 = vsel %vm550, %v175, %v323
        %v567 = vsel %vm550, %v176, %v325
        %v568 = vsel %vm550, %v177, %v327
        %v569 = vsel %vm550, %v178, %v329
        %v570 = vsel %vm550, %v179, %v331
        %v571 = vsel %vm550, %v180, %v333
        %v572 = vsel %vm550, %v181, %v335
        %v573 = vsel %vm550, %v182, %v337
        %v574 = vsel %vm550, %v183, %v339
        %v575 = vsel %vm550, %v184, %v341
        %v576 = vsel %vm550, %v185, %v343
        %v577 = vsel %vm550, %v186, %v345
        %v578 = vsel %vm550, %v187, %v347
        %v579 = vsel %vm550, %v188, %v349
        %v580 = vsel %vm550, %v189, %v351
        %v581 = vsel %vm550, %v190, %v353
        %v582 = vsel %vm550, %v191, %v355
        %vm583 = vcmask 64512
        %v584 = vsel %vm583, %v551, %v455
        %v585 = vsel %vm583, %v552, %v457
        %v586 = vsel %vm583, %v553, %v459
        %v587 = vsel %vm583, %v554, %v461
        %v588 = vsel %vm583, %v555, %v463
        %v589 = vsel %vm583, %v556, %v465
        %v590 = vsel %vm583, %v557, %v467
        %v591 = vsel %vm583, %v558, %v469
        %v592 = vsel %vm583, %v559, %v471
        %v593 = vsel %vm583, %v560, %v473
        %v594 = vsel %vm583, %v561, %v475
        %v595 = vsel %vm583, %v562, %v477
        %v596 = vsel %vm583, %v563, %v479
        %v597 = vsel %vm583, %v564, %v481
        %v598 = vsel %vm583, %v565, %v483
        %v599 = vsel %vm583, %v566, %v485
        %v600 = vsel %vm583, %v567, %v487
        %v601 = vsel %vm583, %v568, %v489
        %v602 = vsel %vm583, %v569, %v491
        %v603 = vsel %vm583, %v570, %v493
        %v604 = vsel %vm583, %v571, %v495
        %v605 = vsel %vm583, %v572, %v497
        %v606 = vsel %vm583, %v573, %v499
        %v607 = vsel %vm583, %v574, %v501
        %v608 = vsel %vm583, %v575, %v503
        %v609 = vsel %vm583, %v576, %v505
        %v610 = vsel %vm583, %v577, %v507
        %v611 = vsel %vm583, %v578, %v509
        %v612 = vsel %vm583, %v579, %v511
        %v613 = vsel %vm583, %v580, %v513
        %v614 = vsel %vm583, %v581, %v515
        %v615 = vsel %vm583, %v582, %v517
        %v616 = vpack.c.bf16 %v585, %v584
        %v617 = vpack.c.bf16 %v587, %v586
        %v618 = vpack.c.bf16 %v589, %v588
        %v619 = vpack.c.bf16 %v591, %v590
        %v620 = vpack.c.bf16 %v593, %v592
        %v621 = vpack.c.bf16 %v595, %v594
        %v622 = vpack.c.bf16 %v597, %v596
        %v623 = vpack.c.bf16 %v599, %v598
        %v624 = vpack.c.bf16 %v601, %v600
        %v625 = vpack.c.bf16 %v603, %v602
        %v626 = vpack.c.bf16 %v605, %v604
        %v627 = vpack.c.bf16 %v607, %v606
        %v628 = vpack.c.bf16 %v609, %v608
        %v629 = vpack.c.bf16 %v611, %v610
        %v630 = vpack.c.bf16 %v613, %v612
        %v631 = vpack.c.bf16 %v615, %v614
        %v632 = vld [vmem:[%s1] sm:$0xf]
        %v633 = vld [vmem:[%s1 + $0x4] sm:$0x3]
        %v636 = vunpack.c.l.b16 %v632
        %v637 = vunpack.c.l.b16 %v633
        %v638 = vpack.c.b16 %v637, %v636
        %vm639 = vcmask 97280
        %v641 = vsel %vm639, %v616, 0
        %v644 = vsel %vm639, %v617, 0
        %v647 = vsel %vm639, %v618, 0
        %v650 = vsel %vm639, %v619, 0
        %v653 = vsel %vm639, %v620, 0
        %v656 = vsel %vm639, %v621, 0
        %v659 = vsel %vm639, %v622, 0
        %v662 = vsel %vm639, %v623, 0
        %v665 = vsel %vm639, %v624, 0
        %v668 = vsel %vm639, %v625, 0
        %v671 = vsel %vm639, %v626, 0
        %v674 = vsel %vm639, %v627, 0
        %v677 = vsel %vm639, %v628, 0
        %v680 = vsel %vm639, %v629, 0
        %v683 = vsel %vm639, %v630, 0
        %v686 = vsel %vm639, %v631, 0
        %v689 = vsel %vm388, %v638, 0
        %691 = vmatprep.subr.bf16.mxu0 0
        %692 = vmatpush1.bf16.msra.mxu0 0
        %693 = vmatprep.subr.bf16.mxu0 0
        %694 = vmatpush1.bf16.msra.mxu0 0
        %695 = vmatprep.subr.bf16.mxu0 0
        %696 = vmatpush1.bf16.msra.mxu0 0
        %697 = vmatprep.subr.bf16.mxu0 0
        %698 = vmatpush1.bf16.msra.mxu0 0
        %699 = vmatprep.subr.bf16.mxu0 0
        %700 = vmatpush1.bf16.msra.mxu0 0
        %701 = vmatprep.subr.bf16.mxu0 0
        %702 = vmatpush1.bf16.msra.mxu0 0
        %703 = vmatprep.subr.bf16.mxu0 0
        %704 = vmatpush1.bf16.msra.mxu0 0
        %705 = vmatprep.subr.bf16.mxu0 0
        %706 = vmatpush1.bf16.msra.mxu0 %v689
        %707 = vmatprep.subr.bf16.mxu0 0
        %708 = vmatpush2.bf16.msra.mxu0 0
        %709 = vmatprep.subr.bf16.mxu0 0
        %710 = vmatpush2.bf16.msra.mxu0 0
        %711 = vmatprep.subr.bf16.mxu0 0
        %712 = vmatpush2.bf16.msra.mxu0 0
        %713 = vmatprep.subr.bf16.mxu0 0
        %714 = vmatpush2.bf16.msra.mxu0 0
        %715 = vmatprep.subr.bf16.mxu0 0
        %716 = vmatpush2.bf16.msra.mxu0 0
        %717 = vmatprep.subr.bf16.mxu0 0
        %718 = vmatpush2.bf16.msra.mxu0 0
        %719 = vmatprep.subr.bf16.mxu0 0
        %720 = vmatpush2.bf16.msra.mxu0 0
        %721 = vmatprep.subr.bf16.mxu0 0
        %722 = vmatpush2.bf16.msra.mxu0 0
        %723 = vmatprep.mubr.bf16.mxu0 0
        %724 = vmatmul.mubr.bf16.gmra.mxu0 %v641
        %v725 = vpop.f32.mrf.mxu0
        %v726 = vadd.f32 0.0, %v725
        %v727 = vpop.f32.mrf.mxu0
        %v728 = vpop.f32.mrf.mxu0
        %v729 = vadd.f32 0.0, %v728
        %v730 = vpop.f32.mrf.mxu0
        %731 = vmatprep.mubr.bf16.mxu0 0
        %732 = vmatmul.mubr.bf16.gmra.mxu0 %v644
        %v733 = vpop.f32.mrf.mxu0
        %v734 = vadd.f32 0.0, %v733
        %v735 = vpop.f32.mrf.mxu0
        %v736 = vpop.f32.mrf.mxu0
        %v737 = vadd.f32 0.0, %v736
        %v738 = vpop.f32.mrf.mxu0
        %739 = vmatprep.mubr.bf16.mxu0 0
        %740 = vmatmul.mubr.bf16.gmra.mxu0 %v647
        %v741 = vpop.f32.mrf.mxu0
        %v742 = vadd.f32 0.0, %v741
        %v743 = vpop.f32.mrf.mxu0
        %v744 = vpop.f32.mrf.mxu0
        %v745 = vadd.f32 0.0, %v744
        %v746 = vpop.f32.mrf.mxu0
        %747 = vmatprep.mubr.bf16.mxu0 0
        %748 = vmatmul.mubr.bf16.gmra.mxu0 %v650
        %v749 = vpop.f32.mrf.mxu0
        %v750 = vadd.f32 0.0, %v749
        %v751 = vpop.f32.mrf.mxu0
        %v752 = vpop.f32.mrf.mxu0
        %v753 = vadd.f32 0.0, %v752
        %v754 = vpop.f32.mrf.mxu0
        %755 = vmatprep.mubr.bf16.mxu0 0
        %756 = vmatmul.mubr.bf16.gmra.mxu0 %v653
        %v757 = vpop.f32.mrf.mxu0
        %v758 = vadd.f32 0.0, %v757
        %v759 = vpop.f32.mrf.mxu0
        %v760 = vpop.f32.mrf.mxu0
        %v761 = vadd.f32 0.0, %v760
        %v762 = vpop.f32.mrf.mxu0
        %763 = vmatprep.mubr.bf16.mxu0 0
        %764 = vmatmul.mubr.bf16.gmra.mxu0 %v656
        %v765 = vpop.f32.mrf.mxu0
        %v766 = vadd.f32 0.0, %v765
        %v767 = vpop.f32.mrf.mxu0
        %v768 = vpop.f32.mrf.mxu0
        %v769 = vadd.f32 0.0, %v768
        %v770 = vpop.f32.mrf.mxu0
        %771 = vmatprep.mubr.bf16.mxu0 0
        %772 = vmatmul.mubr.bf16.gmra.mxu0 %v659
        %v773 = vpop.f32.mrf.mxu0
        %v774 = vadd.f32 0.0, %v773
        %v775 = vpop.f32.mrf.mxu0
        %v776 = vpop.f32.mrf.mxu0
        %v777 = vadd.f32 0.0, %v776
        %v778 = vpop.f32.mrf.mxu0
        %779 = vmatprep.mubr.bf16.mxu0 0
        %780 = vmatmul.mubr.bf16.gmra.mxu0 %v662
        %v781 = vpop.f32.mrf.mxu0
        %v782 = vadd.f32 0.0, %v781
        %v783 = vpop.f32.mrf.mxu0
        %v784 = vpop.f32.mrf.mxu0
        %v785 = vadd.f32 0.0, %v784
        %v786 = vpop.f32.mrf.mxu0
        %787 = vmatprep.mubr.bf16.mxu0 0
        %788 = vmatmul.mubr.bf16.gmra.mxu0 %v665
        %v789 = vpop.f32.mrf.mxu0
        %v790 = vadd.f32 0.0, %v789
        %v791 = vpop.f32.mrf.mxu0
        %v792 = vpop.f32.mrf.mxu0
        %v793 = vadd.f32 0.0, %v792
        %v794 = vpop.f32.mrf.mxu0
        %795 = vmatprep.mubr.bf16.mxu0 0
        %796 = vmatmul.mubr.bf16.gmra.mxu0 %v668
        %v797 = vpop.f32.mrf.mxu0
        %v798 = vadd.f32 0.0, %v797
        %v799 = vpop.f32.mrf.mxu0
        %v800 = vpop.f32.mrf.mxu0
        %v801 = vadd.f32 0.0, %v800
        %v802 = vpop.f32.mrf.mxu0
        %803 = vmatprep.mubr.bf16.mxu0 0
        %804 = vmatmul.mubr.bf16.gmra.mxu0 %v671
        %v805 = vpop.f32.mrf.mxu0
        %v806 = vadd.f32 0.0, %v805
        %v807 = vpop.f32.mrf.mxu0
        %v808 = vpop.f32.mrf.mxu0
        %v809 = vadd.f32 0.0, %v808
        %v810 = vpop.f32.mrf.mxu0
        %811 = vmatprep.mubr.bf16.mxu0 0
        %812 = vmatmul.mubr.bf16.gmra.mxu0 %v674
        %v813 = vpop.f32.mrf.mxu0
        %v814 = vadd.f32 0.0, %v813
        %v815 = vpop.f32.mrf.mxu0
        %v816 = vpop.f32.mrf.mxu0
        %v817 = vadd.f32 0.0, %v816
        %v818 = vpop.f32.mrf.mxu0
        %819 = vmatprep.mubr.bf16.mxu0 0
        %820 = vmatmul.mubr.bf16.gmra.mxu0 %v677
        %v821 = vpop.f32.mrf.mxu0
        %v822 = vadd.f32 0.0, %v821
        %v823 = vpop.f32.mrf.mxu0
        %v824 = vpop.f32.mrf.mxu0
        %v825 = vadd.f32 0.0, %v824
        %v826 = vpop.f32.mrf.mxu0
        %827 = vmatprep.mubr.bf16.mxu0 0
        %828 = vmatmul.mubr.bf16.gmra.mxu0 %v680
        %v829 = vpop.f32.mrf.mxu0
        %v830 = vadd.f32 0.0, %v829
        %v831 = vpop.f32.mrf.mxu0
        %v832 = vpop.f32.mrf.mxu0
        %v833 = vadd.f32 0.0, %v832
        %v834 = vpop.f32.mrf.mxu0
        %835 = vmatprep.mubr.bf16.mxu0 0
        %836 = vmatmul.mubr.bf16.gmra.mxu0 %v683
        %v837 = vpop.f32.mrf.mxu0
        %v838 = vadd.f32 0.0, %v837
        %v839 = vpop.f32.mrf.mxu0
        %v840 = vpop.f32.mrf.mxu0
        %v841 = vadd.f32 0.0, %v840
        %v842 = vpop.f32.mrf.mxu0
        %843 = vmatprep.mubr.bf16.mxu0 0
        %844 = vmatmul.mubr.bf16.gmra.mxu0 %v686
        %v845 = vpop.f32.mrf.mxu0
        %v846 = vadd.f32 0.0, %v845
        %v847 = vpop.f32.mrf.mxu0
        %v848 = vpop.f32.mrf.mxu0
        %v849 = vadd.f32 0.0, %v848
        %v850 = vpop.f32.mrf.mxu0
        %851 = vdwg.mxu0
        %852 = vst [vmem:[%s150] sm:$0xff] %v726
        %853 = vst [vmem:[%s150 + $0x8] sm:$0xff] %v729
        %854 = vst [vmem:[%s150 + $0x10] sm:$0xff] %v734
        %855 = vst [vmem:[%s150 + $0x18] sm:$0xff] %v737
        %856 = vst [vmem:[%s150 + $0x20] sm:$0xff] %v742
        %857 = vst [vmem:[%s150 + $0x28] sm:$0xff] %v745
        %858 = vst [vmem:[%s150 + $0x30] sm:$0xff] %v750
        %859 = vst [vmem:[%s150 + $0x38] sm:$0xff] %v753
        %860 = vst [vmem:[%s150 + $0x40] sm:$0xff] %v758
        %861 = vst [vmem:[%s150 + $0x48] sm:$0xff] %v761
        %862 = vst [vmem:[%s150 + $0x50] sm:$0xff] %v766
        %863 = vst [vmem:[%s150 + $0x58] sm:$0xff] %v769
        %864 = vst [vmem:[%s150 + $0x60] sm:$0xff] %v774
        %865 = vst [vmem:[%s150 + $0x68] sm:$0xff] %v777
        %866 = vst [vmem:[%s150 + $0x70] sm:$0xff] %v782
        %867 = vst [vmem:[%s150 + $0x78] sm:$0xff] %v785
        %868 = vst [vmem:[%s150 + $0x80] sm:$0xff] %v790
        %869 = vst [vmem:[%s150 + $0x88] sm:$0xff] %v793
        %870 = vst [vmem:[%s150 + $0x90] sm:$0xff] %v798
        %871 = vst [vmem:[%s150 + $0x98] sm:$0xff] %v801
        %872 = vst [vmem:[%s150 + $0xa0] sm:$0xff] %v806
        %873 = vst [vmem:[%s150 + $0xa8] sm:$0xff] %v809
        %874 = vst [vmem:[%s150 + $0xb0] sm:$0xff] %v814
        %875 = vst [vmem:[%s150 + $0xb8] sm:$0xff] %v817
        %876 = vst [vmem:[%s150 + $0xc0] sm:$0xff] %v822
        %877 = vst [vmem:[%s150 + $0xc8] sm:$0xff] %v825
        %878 = vst [vmem:[%s150 + $0xd0] sm:$0xff] %v830
        %879 = vst [vmem:[%s150 + $0xd8] sm:$0xff] %v833
        %880 = vst [vmem:[%s150 + $0xe0] sm:$0xff] %v838
        %881 = vst [vmem:[%s150 + $0xe8] sm:$0xff] %v841
        %882 = vst [vmem:[%s150 + $0xf0] sm:$0xff] %v846
        %883 = vst [vmem:[%s150 + $0xf8] sm:$0xff] %v849
        %s884 = sand.u32 %s85, 1
        %s885 = scalar_lea.sflag [#allocation3], %s884
        %s886 = sand.u32 %s85, 1
        %s887 = smul.addr %s886, 256
        %s888 = scalar_lea.vmem [#allocation2], %s887
        // Predicated region
        $region29: #{tpu_custom_call.1} parent=27 // pred_check
          %p889 = pneg %p95
        $region30: #{tpu_custom_call.1} parent=27 // pred_check_branch
          %891 = sbr.rel (%p889) target = $region32
        $region31: #{tpu_custom_call.1} parent=27 // pred_region
          %s892 = smul.u32 32, %s21
          %s894 = ssub.s32 4096, 4096
          %895 = vsyncadd %s885, %s894
          %s896 = smul.addr %s20, 64
          %s897 = sadd.s32 %s892, %s896
          %s898 = smul.addr %s897, 128
          %s899 = scalar_lea.hbm %s2, %s898
          %s900 = sshll.u32 %s888, 4
          %s901 = int_to_ptr.vmem [resolvable:$true] %s900
          %906 = dma.vmem_to_hbm [thread:$0]  %s901, 4096, %s899, %s885, 128, 128, 8
        $region32: #{tpu_custom_call.1} parent=27 // pred_fallthru
          _
      $region28: #{tpu_custom_call.1} parent=5 // pred_fallthru
        _
      %p907 = scmp.le.s32.totalorder 2, %s11
      // Predicated region
      $region33: #{tpu_custom_call.1} parent=5 // pred_check
        %p908 = pneg %p907
      $region34: #{tpu_custom_call.1} parent=5 // pred_check_branch
        %910 = sbr.rel (%p908) target = $region36
      $region35: #{tpu_custom_call.1} parent=5 // pred_region
        %s911 = ssub.s32 %s11, 2
        // Predicated region
        $region37: #{tpu_custom_call.1} parent=35 // pred_check
          %p912 = pneg %p101
        $region38: #{tpu_custom_call.1} parent=35 // pred_check_branch
          %914 = sbr.rel (%p912) target = $region40
        $region39: #{tpu_custom_call.1} parent=35 // pred_region
          %s915 = sand.u32 %s86, 1
          %s916 = scalar_lea.sflag [#allocation3], %s915
          %s917 = sand.u32 %s86, 1
          %s918 = smul.addr %s917, 256
          %s919 = scalar_lea.vmem [#allocation2], %s918
          %920 = dma.done %s916, 4096
        $region40: #{tpu_custom_call.1} parent=35 // pred_fallthru
          _
      $region36: #{tpu_custom_call.1} parent=5 // pred_fallthru
        _
    $region6: #{tpu_custom_call.1} parent=1 // loop_footer
      %s15 = sadd.s32 1, %s11
    $region7: #{tpu_custom_call.1} parent=1 // loop_footer_branch
      %10 = sbr.rel target = $region3
    $region8: #{tpu_custom_call.1} parent=1 // loop_exit
      _
    %921 = vsyncpa [#allocation3], 1
    %s922 = scalar_lea.sflag [#allocation3], 1
    %923 = vsyncpa %s922, 1

</llo_original>
